<compile_context>
chip_gen: v7x
topology: tpu7x:2x2x1
jax: 0.10.0
libtpu: 0.0.40
codegen_flags: <defaults>
</compile_context>

<pallas_src>
import functools
import math

import jax
import jax.numpy as jnp
from jax import lax
from jax.experimental import pallas as pl
from jax.experimental.pallas import tpu as pltpu


def _round_up(x: int, m: int) -> int:
    return ((x + m - 1) // m) * m


def _kernel(v_ref, out_ref, *, scale, chunk, n_full, tail, tile_r):
    # v rows: [v0; v1], shape (2, dim). Tiny; re-read each grid step (negligible).
    v = v_ref[...].astype(jnp.float32)
    v0 = v[0:1, :]
    v1 = v[1:2, :]

    # Norms + dot product: two tiny cross-lane reductions.
    sq = jnp.sum(v * v, axis=-1, keepdims=True)            # (2, 1): [|v0|^2, |v1|^2]
    dot = jnp.sum(v0 * v1, axis=-1, keepdims=True)          # (1, 1)
    inv_n0 = lax.rsqrt(sq[0:1, :])
    inv_n1 = lax.rsqrt(sq[1:2, :])

    cos_g = dot * (inv_n0 * inv_n1)                          # cos(gamma)
    # sin(gamma) = sqrt(1 - cos^2); the eps keeps the (degenerate) collinear case
    # finite instead of the reference's NaN/Inf. Deliberate deviation.
    inv_sin_g = lax.rsqrt(jnp.maximum(1.0 - cos_g * cos_g, 1e-30))

    norm_v0 = v0 * inv_n0                                    # (1, dim)
    norm_v1 = v1 * inv_n1                                    # (1, dim)

    row0 = pl.program_id(0) * tile_r                         # first rank row of this block

    def emit(start, rows):
        # theta / sin / cos built in-kernel (EUP) from an iota: no lane-sparse inputs.
        ridx = lax.broadcasted_iota(jnp.int32, (rows, 1), 0) + (row0 + start)
        theta = ridx.astype(jnp.float32) * scale
        s_ratio = jnp.sin(theta) * inv_sin_g                 # sin(theta)/sin(gamma)
        coef0 = jnp.cos(theta) - cos_g * s_ratio             # sin(gamma-theta)/sin(gamma)
        out_ref[pl.ds(start, rows), :] = (
            coef0 * norm_v0 + s_ratio * norm_v1).astype(out_ref.dtype)

    # Process the block in fixed-size row chunks so the (rows, 1) coefficient
    # columns stay a few dozen vregs even when the output block is several MiB.
    if n_full == 1:
        emit(0, chunk)
    elif n_full > 1:
        def loop_body(c, carry):
            emit(pl.multiple_of(c * chunk, chunk), chunk)
            return carry
        lax.fori_loop(0, n_full, loop_body, 0, unroll=False)
    if tail > 0:
        emit(n_full * chunk, tail)                           # static start / static rows


def _closed_form(v0, v1, num_ranks):
    """Fused pure-JAX closed form (no arccos) for the launch-overhead regime."""
    scale = math.pi / (num_ranks - 1) if num_ranks > 1 else 0.0
    theta = jnp.arange(num_ranks, dtype=jnp.float32)[:, None] * scale
    v0 = v0.astype(jnp.float32)
    v1 = v1.astype(jnp.float32)
    dot = jnp.sum(v0 * v1, axis=-1, keepdims=True)
    inv_n0 = lax.rsqrt(jnp.sum(v0 * v0, axis=-1, keepdims=True))
    inv_n1 = lax.rsqrt(jnp.sum(v1 * v1, axis=-1, keepdims=True))
    cos_g = dot * (inv_n0 * inv_n1)
    inv_sin_g = lax.rsqrt(jnp.maximum(1.0 - cos_g * cos_g, 1e-30))
    s_ratio = jnp.sin(theta) * inv_sin_g
    coef0 = jnp.cos(theta) - cos_g * s_ratio
    return coef0 * (v0 * inv_n0) + s_ratio * (v1 * inv_n1)


def semicircular_proxies(v0: jax.Array, v1: jax.Array, num_ranks: int, *,
                         use_pallas=None, target_block_bytes: int = 8 << 20,
                         chunk: int = 256) -> jax.Array:
    """Pallas implementation of SemicircularProxiesLearner.forward()."""
    assert v0.ndim == 2 and v0.shape[0] == 1 and v0.shape == v1.shape
    dim = v0.shape[1]
    dim_lanes = _round_up(dim, 128)          # true VMEM footprint of one output row

    if use_pallas is None:
        # Below ~64K lane-padded output elements everything is pallas_call launch
        # overhead; a fused XLA op is strictly faster there.
        use_pallas = num_ranks * dim_lanes >= (64 * 1024)
    if not use_pallas:
        return _closed_form(v0, v1, num_ranks)

    # --- tile sizing: ~8 MiB of (lane-padded) output block per grid step ---
    row_bytes = dim_lanes * 4
    rows_for_target = max(chunk, (target_block_bytes // row_bytes) // chunk * chunk)
    if num_ranks <= rows_for_target:
        tile_r = num_ranks                   # single block / single step (v6e-friendly)
        grid_n = 1
    else:
        tile_r = rows_for_target
        grid_n = pl.cdiv(num_ranks, tile_r)
        if grid_n > 1 and grid_n % 2 == 1:   # even grid so ("parallel",) splits 2 TCs (v7x)
            alt = _round_up(pl.cdiv(num_ranks, grid_n + 1), chunk)
            tile_r = max(chunk, alt)
            grid_n = pl.cdiv(num_ranks, tile_r)

    n_full = tile_r // chunk
    tail = tile_r - n_full * chunk

    # theta scale depends only on num_ranks (static) -> baked into the kernel.
    # TODO(synk): num_ranks == 1 divides by zero in the reference (NaN output);
    # here theta is forced to 0 and the proxy row is just norm_v0.
    scale = math.pi / (num_ranks - 1) if num_ranks > 1 else 0.0

    # Single tiny input stack [v0; v1]; cast happens in-kernel.
    v = jnp.concatenate([v0, v1], axis=0)                    # (2, dim)

    # Explicit VMEM budget: double-buffered output block + input + spill headroom.
    out_block_bytes = tile_r * dim_lanes * 4
    vmem_limit = int(min(max(2 * out_block_bytes + (8 << 20), 32 << 20), 56 << 20))

    kernel = functools.partial(_kernel, scale=scale, chunk=chunk,
                               n_full=n_full, tail=tail, tile_r=tile_r)
    return pl.pallas_call(
        kernel,
        out_shape=jax.ShapeDtypeStruct((num_ranks, dim), jnp.float32),
        grid=(grid_n,),
        in_specs=[pl.BlockSpec((2, dim), lambda i: (0, 0))],
        out_specs=pl.BlockSpec((tile_r, dim), lambda i: (i, 0)),
        compiler_params=pltpu.CompilerParams(
            dimension_semantics=("parallel",),
            vmem_limit_bytes=vmem_limit),
    )(v)


def _reference(v0, v1, num_ranks):
    """Pure-JAX reference mirroring the PyTorch forward exactly (arccos form)."""
    rank_ids = jnp.arange(num_ranks, dtype=jnp.float32)[:, None]
    theta = rank_ids * math.pi / (num_ranks - 1)
    cos_sim = jnp.sum(v0 * v1, axis=-1) / (
        jnp.linalg.norm(v0, axis=-1) * jnp.linalg.norm(v1, axis=-1))
    gamma = jnp.arccos(cos_sim)
    norm_v0 = v0 / jnp.linalg.norm(v0, axis=-1)
    norm_v1 = v1 / jnp.linalg.norm(v1, axis=-1)
    return (jnp.sin(gamma - theta) / jnp.sin(gamma) * norm_v0
            + jnp.sin(theta) / jnp.sin(gamma) * norm_v1)


if __name__ == "__main__":
    key = jax.random.PRNGKey(0)
    k0, k1 = jax.random.split(key)

    # Deterministic xavier_normal_-style init for (1, dim) params:
    # std = sqrt(2 / (fan_in + fan_out)) = sqrt(2 / (dim + 1)).
    num_ranks, dim = 8, 32
    std = math.sqrt(2.0 / (dim + 1))
    v0 = jax.random.normal(k0, (1, dim), dtype=jnp.float32) * std
    v1 = jax.random.normal(k1, (1, dim), dtype=jnp.float32) * std

    # Case 1: module-sized shapes, Pallas path forced (single block, single step).
    out = jax.block_until_ready(semicircular_proxies(v0, v1, num_ranks, use_pallas=True))
    ref = _reference(v0, v1, num_ranks)
    assert out.shape == (num_ranks, dim) and out.dtype == jnp.float32
    err = float(jnp.max(jnp.abs(out - ref)))
    assert jnp.allclose(out, ref, atol=5e-5, rtol=5e-5), err

    # Case 2: multi-step grid + in-kernel chunk loop + partial final block,
    # exercised at small shapes by forcing a tiny tile (16 rows) and chunk (8).
    num_ranks2 = 44
    out2 = jax.block_until_ready(
        semicircular_proxies(v0, v1, num_ranks2, use_pallas=True,
                             target_block_bytes=16 * 128 * 4, chunk=8))
    ref2 = _reference(v0, v1, num_ranks2)
    assert out2.shape == (num_ranks2, dim) and out2.dtype == jnp.float32
    err2 = float(jnp.max(jnp.abs(out2 - ref2)))
    assert jnp.allclose(out2, ref2, atol=5e-5, rtol=5e-5), err2

    # Case 3: auto dispatch (small problem -> fused XLA closed form).
    out3 = jax.block_until_ready(semicircular_proxies(v0, v1, num_ranks))
    assert jnp.allclose(out3, ref, atol=5e-5, rtol=5e-5)

    print("KERNEL_OK")
</pallas_src>

<mosaic_0001>
module attributes {stable_mosaic.version = 11 : i64} {
  func.func @_kernel(%arg0: i32, %arg1: memref<2x32xf32, #tpu.memory_space<vmem>>, %arg2: memref<8x32xf32, #tpu.memory_space<vmem>>) attributes {dimension_semantics = [#tpu.dimension_semantics<parallel>], iteration_bounds = array<i64: 1>, scalar_prefetch = 0 : i64, scratch_operands = 0 : i64, tpu.core_type = #tpu.core_type<tc>, window_params = [{pipeline_mode = #tpu.pipeline_mode<synchronous>, transform_indices = @transform_0, window_bounds = array<i64: 2, 32>}, {transform_indices = @transform_1, window_bounds = array<i64: 8, 32>}]} {
    %c0 = arith.constant 0 : index
    %c0_0 = arith.constant 0 : index
    %0 = vector.load %arg1[%c0, %c0_0] : memref<2x32xf32, #tpu.memory_space<vmem>>, vector<2x32xf32>
    %1 = vector.extract_strided_slice %0 {offsets = [0, 0], sizes = [1, 32], strides = [1, 1]} : vector<2x32xf32> to vector<1x32xf32>
    %2 = vector.extract_strided_slice %0 {offsets = [1, 0], sizes = [1, 32], strides = [1, 1]} : vector<2x32xf32> to vector<1x32xf32>
    %3 = arith.mulf %0, %0 : vector<2x32xf32>
    %cst = arith.constant dense<0.000000e+00> : vector<2xf32>
    %4 = vector.multi_reduction <add>, %3, %cst [1] : vector<2x32xf32> to vector<2xf32>
    %5 = vector.shape_cast %4 : vector<2xf32> to vector<2x1xf32>
    %6 = arith.mulf %1, %2 : vector<1x32xf32>
    %cst_1 = arith.constant dense<0.000000e+00> : vector<1xf32>
    %7 = vector.multi_reduction <add>, %6, %cst_1 [1] : vector<1x32xf32> to vector<1xf32>
    %8 = vector.shape_cast %7 : vector<1xf32> to vector<1x1xf32>
    %9 = vector.extract_strided_slice %5 {offsets = [0, 0], sizes = [1, 1], strides = [1, 1]} : vector<2x1xf32> to vector<1x1xf32>
    %10 = math.rsqrt %9 : vector<1x1xf32>
    %11 = vector.extract_strided_slice %5 {offsets = [1, 0], sizes = [1, 1], strides = [1, 1]} : vector<2x1xf32> to vector<1x1xf32>
    %12 = math.rsqrt %11 : vector<1x1xf32>
    %13 = arith.mulf %10, %12 : vector<1x1xf32>
    %14 = arith.mulf %8, %13 : vector<1x1xf32>
    %15 = arith.mulf %14, %14 : vector<1x1xf32>
    %cst_2 = arith.constant 1.000000e+00 : f32
    %16 = vector.broadcast %cst_2 : f32 to vector<1x1xf32>
    %17 = arith.subf %16, %15 : vector<1x1xf32>
    %cst_3 = arith.constant 1.000000e-30 : f32
    %18 = vector.broadcast %cst_3 : f32 to vector<1x1xf32>
    %19 = arith.maximumf %17, %18 : vector<1x1xf32>
    %20 = math.rsqrt %19 : vector<1x1xf32>
    %21 = vector.broadcast %10 : vector<1x1xf32> to vector<1x32xf32>
    %22 = arith.mulf %1, %21 : vector<1x32xf32>
    %23 = vector.broadcast %12 : vector<1x1xf32> to vector<1x32xf32>
    %24 = arith.mulf %2, %23 : vector<1x32xf32>
    %c8_i32 = arith.constant 8 : i32
    %25 = arith.muli %arg0, %c8_i32 : i32
    %26 = tpu.iota {dimensions = array<i32: 0>} : vector<8x1xi32>
    %c0_i32 = arith.constant 0 : i32
    %27 = arith.addi %25, %c0_i32 : i32
    %28 = vector.broadcast %27 : i32 to vector<8x1xi32>
    %29 = arith.addi %26, %28 : vector<8x1xi32>
    %30 = arith.sitofp %29 : vector<8x1xi32> to vector<8x1xf32>
    %cst_4 = arith.constant 0.448798954 : f32
    %31 = vector.broadcast %cst_4 : f32 to vector<8x1xf32>
    %32 = arith.mulf %30, %31 : vector<8x1xf32>
    %33 = math.sin %32 : vector<8x1xf32>
    %34 = vector.broadcast %20 : vector<1x1xf32> to vector<8x1xf32>
    %35 = arith.mulf %33, %34 : vector<8x1xf32>
    %36 = math.cos %32 : vector<8x1xf32>
    %37 = vector.broadcast %14 : vector<1x1xf32> to vector<8x1xf32>
    %38 = arith.mulf %37, %35 : vector<8x1xf32>
    %39 = arith.subf %36, %38 : vector<8x1xf32>
    %40 = vector.broadcast %39 : vector<8x1xf32> to vector<8x32xf32>
    %41 = vector.broadcast %22 : vector<1x32xf32> to vector<8x32xf32>
    %42 = arith.mulf %40, %41 : vector<8x32xf32>
    %43 = vector.broadcast %35 : vector<8x1xf32> to vector<8x32xf32>
    %44 = vector.broadcast %24 : vector<1x32xf32> to vector<8x32xf32>
    %45 = arith.mulf %43, %44 : vector<8x32xf32>
    %46 = arith.addf %42, %45 : vector<8x32xf32>
    %c0_5 = arith.constant 0 : index
    %c0_6 = arith.constant 0 : index
    %47 = vector.load %arg2[%c0_5, %c0_6] : memref<8x32xf32, #tpu.memory_space<vmem>>, vector<8x32xf32>
    tpu.vector_store %arg2[%c0_5, %c0_6], %46 {strides = array<i32>} : memref<8x32xf32, #tpu.memory_space<vmem>>, vector<8x32xf32>,
    return
  }
  func.func @transform_0(%arg0: i32) -> (i32, i32) {
    %c0_i32 = arith.constant 0 : i32
    %c0_i32_0 = arith.constant 0 : i32
    %c0_i32_1 = arith.constant 0 : i32
    return %c0_i32, %c0_i32_0 : i32, i32
  }
  func.func @transform_1(%arg0: i32) -> (i32, i32) {
    %c0_i32 = arith.constant 0 : i32
    %c0_i32_0 = arith.constant 0 : i32
    return %arg0, %c0_i32 : i32, i32
  }
}

</mosaic_0001>

<llo_original>
// kernel: tpu_custom_call.1
$region0: #{tpu_custom_call.1}
  #allocation0 [shape = 'u32[]', space=smem, size = 0x4, offset = 0x4, fixed_abs, tag = 'smem constant byte address 0x4 - core index']
  #allocation1 [shape = 'u32[144,128]{1,0:T(1,128)}', space=vmem, size = 0x12000, scoped, tag = 'internal scratch']
  %s0 = inlined_call_operand.hbm [shape: f32[2,32], index: 0, kind: input, shape index: {}]
  %s1 = inlined_call_operand.hbm [shape: f32[8,32], index: 1, kind: output, shape index: {}]
  %s2 = sld [smem:[#allocation0]]
  $region18: #{tpu_custom_call.1} parent=0
    _
  %s4 = ssub.s32 1, %s2
  %s5 = scalar_select 0, %s4, %s2
  $region1: #{tpu_custom_call.1} parent=0
    #allocation2 [shape = 'u8[1024]{0}', space=vmem, size = 0x400, scoped, tag = 'input window, operand 0, single buffered']
    #allocation3 [shape = 's32[1]{0}', space=sflag, size = 0x4, scoped, tag = 'scoped memory for tpu_custom_call.1']
    #allocation4 [shape = 's32[1]{0}', space=sflag, size = 0x4, scoped, tag = 'scoped memory for tpu_custom_call.1']
    #allocation5 [shape = 'u8[4096]{0}', space=vmem, size = 0x1000, scoped, tag = 'output window, operand 0, single buffered']
    %6 = vsyncpa [#allocation3], 0
    %7 = vsyncpa [#allocation4], 0
    // Predicated region
    $region2: #{tpu_custom_call.1} parent=1 // pred_check
      _
    $region3: #{tpu_custom_call.1} parent=1 // pred_check_branch
      %9 = sbr.rel (0) target = $region5
    $region4: #{tpu_custom_call.1} parent=1 // pred_region
      %s11 = ssub.s32 32, 32
      %12 = vsyncadd [#allocation3], %s11
      %s14 = sshll.u32 [#allocation2], 4
      %s15 = int_to_ptr.vmem [resolvable:$true] %s14
      %17 = dma.hbm_to_vmem [thread:$0]  %s0, 32, %s15, [#allocation3]
    $region5: #{tpu_custom_call.1} parent=1 // pred_fallthru
      _
    // Predicated region
    $region6: #{tpu_custom_call.1} parent=1 // pred_check
      _
    $region7: #{tpu_custom_call.1} parent=1 // pred_check_branch
      %19 = sbr.rel (0) target = $region9
    $region8: #{tpu_custom_call.1} parent=1 // pred_region
      %20 = dma.done [#allocation3], 32
    $region9: #{tpu_custom_call.1} parent=1 // pred_fallthru
      _
    %v21 = vld [vmem:[#allocation2] sm:$0x3]
    %v22 = vmul.f32 %v21, %v21
    %vm23 = vcmask 254976
    %v24 = vsel %vm23, %v22, 0.0
    %25 = vadd.xlane.f32.xlu0 %v24
    %v26 = vpop.xlane.xlu0 %25
    %v28 = vrot.slane %v21, 1
    %v30 = vmul.f32 %v21, %v28
    %vm31 = vcmask 253952
    %v32 = vsel %vm31, %v30, 0.0
    %33 = vadd.xlane.f32.xlu0 %v32
    %v34 = vpop.xlane.xlu0 %33
    %v35 = vrsqrt.pop %v26
    %v37 = vrot.slane %v35, 1
    %v39 = vmul.f32 %v35, %v37
    %v40 = vmul.f32 %v34, %v39
    %v41 = vmul.f32 %v40, %v40
    %v42 = vsub.f32 1.0, %v41
    %v43 = vmax.f32 %v42, 1e-30
    %v44 = vrsqrt.pop %v43
    %v45 = vmul.f32 %v21, %v35
    %s46 = smul.u32 0, 8
    %v47 = vlaneseq
    %v48 = vshrl.u32 %v47, 7
    %v49 = vstv %s46
    %v50 = vadd.s32 %v48, %v49
    %v51 = vcvt.s32.f32 %v50
    %v52 = vmul.f32 %v51, 0.44879895
    %v53 = vand.u32 2147483647, %v52
    %vm54 = vcmp.le.f32.partialorder %v53, 0.7853982
    %vm55 = vcmp.lt.s32.totalorder %v52, 0
    %v56 = vand.u32 %v52, 2139095040
    %v57 = vshrl.u32 %v56, 23
    %v58 = vsub.s32 %v57, 127
    %v59 = vand.u32 2147483647, %v52
    %v60 = vand.u32 %v59, 8388607
    %v61 = vor.u32 %v60, 8388608
    %v62 = vsub.s32 0, %v61
    %v63 = vadd.s32 %v58, 1
    %vm64 = vcmp.gt.s32.totalorder %v63, 0
    %v65 = vsel %vm64, %v63, 0
    %v66 = vshrl.u32 %v65, 5
    %v67 = vand.u32 %v65, 31
    %v68 = vsub.s32 32, %v67
    %v69 = vshrl.u32 683565275, %v68
    %v70 = vshll.u32 683565275, %v67
    %v71 = vshrl.u32 2475754826, %v68
    %v72 = vor.u32 %v70, %v71
    %v73 = vshll.u32 2475754826, %v67
    %v74 = vshrl.u32 2131351028, %v68
    %v75 = vor.u32 %v73, %v74
    %v76 = vshll.u32 2131351028, %v67
    %v77 = vshrl.u32 2102212464, %v68
    %v78 = vor.u32 %v76, %v77
    %v79 = vshll.u32 2102212464, %v67
    %v80 = vshrl.u32 920167782, %v68
    %v81 = vor.u32 %v79, %v80
    %v82 = vshll.u32 920167782, %v67
    %v83 = vshrl.u32 1326507024, %v68
    %v84 = vor.u32 %v82, %v83
    %vm85 = vcmp.lt.s32.totalorder %v66, 1
    %vm86 = vcmp.lt.s32.totalorder %v66, 2
    %vm87 = vcmp.lt.s32.totalorder %v66, 3
    %vm88 = vcmp.lt.s32.totalorder %v66, 4
    %v89 = vsel %vm85, %v69, %v72
    %v90 = vsel %vm88, %v78, 2102212464
    %v91 = vsel %vm87, %v75, %v90
    %v92 = vsel %vm86, %v89, %v91
    %v93 = vsel %vm85, %v72, %v75
    %v94 = vsel %vm88, %v81, 920167782
    %v95 = vsel %vm87, %v78, %v94
    %v96 = vsel %vm86, %v93, %v95
    %v97 = vsel %vm85, %v75, %v78
    %v98 = vsel %vm88, %v84, 1326507024
    %v99 = vsel %vm87, %v81, %v98
    %v100 = vsel %vm86, %v97, %v99
    %v101 = vshll.u32 %v61, 8
    %v102 = vmul.u32.u64.compose %v101, %v100
    %v103 = vextract.low.u32 %v102
    %v104 = vextract.high.u32 %v102
    %v105 = vmul.u32.u64.compose %v101, %v96
    %v106 = vextract.low.u32 %v105
    %v107 = vextract.high.u32 %v105
    %v108 = vmul.u32 %v101, %v92
    %v109 = vadd.s32 %v104, %v106
    %vm110 = vc.u32 %v104, %v106
    %v111 = vadd.s32 %v107, 1
    %v112 = vsel %vm110, %v111, %v107
    %v113 = vadd.s32 %v108, %v112
    %v114 = vadd.s32 %v113, 536870912
    %v115 = vshrl.u32 %v114, 30
    %v116 = vshll.u32 %v115, 30
    %v117 = vsub.s32 %v113, %v116
    %vm118 = vcmp.lt.s32.totalorder %v117, 0
    %v119 = vsub.s32 0, %v117
    %v120 = vsel %vm118, %v119, %v117
    %v121 = vclz %v120
    %v122 = vsub.s32 %v121, 2
    %vm123 = vcmp.gt.s32.totalorder 0, %v122
    %v124 = vsel %vm123, 0, %v122
    %v125 = vsub.s32 32, %v124
    %v126 = vshll.u32 %v117, %v124
    %v127 = vshrl.u32 %v109, %v125
    %v128 = vor.u32 %v126, %v127
    %v129 = vsub.s32 4294967266, %v124
    %v130 = vadd.s32 %v129, 127
    %v131 = vshll.u32 %v130, 23
    %v132 = vor.u32 4788187, %v131
    %v133 = vand.u32 2147483647, %v132
    %v135 = vcvt.s32.f32 %v128
    %v136 = vmul.f32 %v135, %v133
    %v137 = vxor.u32 %v136, 2147483648
    %v138 = vsel %vm55, %v137, %v136
    %v139 = vsub.s32 4, %v115
    %v140 = vsel %vm55, %v139, %v115
    %v141 = vsel %vm54, %v52, %v138
    %v142 = vsel %vm54, 0, %v140
    %v143 = vcosq.f32.pop %v141
    %v144 = vsinq.f32.pop %v141
    %vm145 = vweird.f32 %v52
    %v146 = vadd.s32 %v142, 3
    %v147 = vand.u32 %v146, 3
    %vm148 = vcmp.lt.s32.totalorder %v147, 2
    %vm149 = vcmp.eq.s32.totalorder %v147, 0
    %v150 = vxor.u32 %v144, 2147483648
    %v151 = vsel %vm149, %v143, %v150
    %vm152 = vcmp.eq.s32.totalorder %v147, 2
    %v153 = vxor.u32 %v143, 2147483648
    %v154 = vsel %vm152, %v153, %v144
    %v155 = vsel %vm148, %v151, %v154
    %v156 = vsel %vm145, nan, %v155
    %v157 = vlaneseq
    %v158 = vshrl.u32 %v157, 7
    %v159 = vsub.s32 0, %v158
    %v160 = vrot.slane %v44, %v159
    %v161 = vmul.f32 %v156, %v160
    %v162 = vand.u32 2147483647, %v52
    %vm163 = vcmp.le.f32.partialorder %v162, 0.7853982
    %vm164 = vcmp.lt.s32.totalorder %v52, 0
    %v165 = vand.u32 %v52, 2139095040
    %v166 = vshrl.u32 %v165, 23
    %v167 = vsub.s32 %v166, 127
    %v168 = vand.u32 2147483647, %v52
    %v169 = vand.u32 %v168, 8388607
    %v170 = vor.u32 %v169, 8388608
    %v171 = vsub.s32 0, %v170
    %v172 = vadd.s32 %v167, 1
    %vm173 = vcmp.gt.s32.totalorder %v172, 0
    %v174 = vsel %vm173, %v172, 0
    %v175 = vshrl.u32 %v174, 5
    %v176 = vand.u32 %v174, 31
    %v177 = vsub.s32 32, %v176
    %v178 = vshrl.u32 683565275, %v177
    %v179 = vshll.u32 683565275, %v176
    %v180 = vshrl.u32 2475754826, %v177
    %v181 = vor.u32 %v179, %v180
    %v182 = vshll.u32 2475754826, %v176
    %v183 = vshrl.u32 2131351028, %v177
    %v184 = vor.u32 %v182, %v183
    %v185 = vshll.u32 2131351028, %v176
    %v186 = vshrl.u32 2102212464, %v177
    %v187 = vor.u32 %v185, %v186
    %v188 = vshll.u32 2102212464, %v176
    %v189 = vshrl.u32 920167782, %v177
    %v190 = vor.u32 %v188, %v189
    %v191 = vshll.u32 920167782, %v176
    %v192 = vshrl.u32 1326507024, %v177
    %v193 = vor.u32 %v191, %v192
    %vm194 = vcmp.lt.s32.totalorder %v175, 1
    %vm195 = vcmp.lt.s32.totalorder %v175, 2
    %vm196 = vcmp.lt.s32.totalorder %v175, 3
    %vm197 = vcmp.lt.s32.totalorder %v175, 4
    %v198 = vsel %vm194, %v178, %v181
    %v199 = vsel %vm197, %v187, 2102212464
    %v200 = vsel %vm196, %v184, %v199
    %v201 = vsel %vm195, %v198, %v200
    %v202 = vsel %vm194, %v181, %v184
    %v203 = vsel %vm197, %v190, 920167782
    %v204 = vsel %vm196, %v187, %v203
    %v205 = vsel %vm195, %v202, %v204
    %v206 = vsel %vm194, %v184, %v187
    %v207 = vsel %vm197, %v193, 1326507024
    %v208 = vsel %vm196, %v190, %v207
    %v209 = vsel %vm195, %v206, %v208
    %v210 = vshll.u32 %v170, 8
    %v211 = vmul.u32.u64.compose %v210, %v209
    %v212 = vextract.low.u32 %v211
    %v213 = vextract.high.u32 %v211
    %v214 = vmul.u32.u64.compose %v210, %v205
    %v215 = vextract.low.u32 %v214
    %v216 = vextract.high.u32 %v214
    %v217 = vmul.u32 %v210, %v201
    %v218 = vadd.s32 %v213, %v215
    %vm219 = vc.u32 %v213, %v215
    %v220 = vadd.s32 %v216, 1
    %v221 = vsel %vm219, %v220, %v216
    %v222 = vadd.s32 %v217, %v221
    %v223 = vadd.s32 %v222, 536870912
    %v224 = vshrl.u32 %v223, 30
    %v225 = vshll.u32 %v224, 30
    %v226 = vsub.s32 %v222, %v225
    %vm227 = vcmp.lt.s32.totalorder %v226, 0
    %v228 = vsub.s32 0, %v226
    %v229 = vsel %vm227, %v228, %v226
    %v230 = vclz %v229
    %v231 = vsub.s32 %v230, 2
    %vm232 = vcmp.gt.s32.totalorder 0, %v231
    %v233 = vsel %vm232, 0, %v231
    %v234 = vsub.s32 32, %v233
    %v235 = vshll.u32 %v226, %v233
    %v236 = vshrl.u32 %v218, %v234
    %v237 = vor.u32 %v235, %v236
    %v238 = vsub.s32 4294967266, %v233
    %v239 = vadd.s32 %v238, 127
    %v240 = vshll.u32 %v239, 23
    %v241 = vor.u32 4788187, %v240
    %v242 = vand.u32 2147483647, %v241
    %v244 = vcvt.s32.f32 %v237
    %v245 = vmul.f32 %v244, %v242
    %v246 = vxor.u32 %v245, 2147483648
    %v247 = vsel %vm164, %v246, %v245
    %v248 = vsub.s32 4, %v224
    %v249 = vsel %vm164, %v248, %v224
    %v250 = vsel %vm163, %v52, %v247
    %v251 = vsel %vm163, 0, %v249
    %v252 = vcosq.f32.pop %v250
    %v253 = vsinq.f32.pop %v250
    %vm254 = vweird.f32 %v52
    %v255 = vand.u32 %v251, 3
    %vm256 = vcmp.lt.s32.totalorder %v255, 2
    %vm257 = vcmp.eq.s32.totalorder %v255, 0
    %v258 = vxor.u32 %v253, 2147483648
    %v259 = vsel %vm257, %v252, %v258
    %vm260 = vcmp.eq.s32.totalorder %v255, 2
    %v261 = vxor.u32 %v252, 2147483648
    %v262 = vsel %vm260, %v261, %v253
    %v263 = vsel %vm256, %v259, %v262
    %v264 = vsel %vm254, nan, %v263
    %v265 = vlaneseq
    %v266 = vshrl.u32 %v265, 7
    %v267 = vsub.s32 0, %v266
    %v268 = vrot.slane %v40, %v267
    %v269 = vmul.f32 %v268, %v161
    %v270 = vsub.f32 %v264, %v269
    %272 = vset.pattern.permute.xlu0 0
    %273 = vperm.xlu0 %272, %v270
    %v274 = vpop.permute.xlu0 %273
    %v276 = vlaneseq
    %v277 = vshrl.u32 %v276, 7
    %v278 = vsub.s32 0, %v277
    %v279 = vrot.slane %v45, %v278
    %v280 = vmul.f32 %v274, %v279
    %282 = vset.pattern.permute.xlu0 0
    %283 = vperm.xlu0 %282, %v161
    %v284 = vpop.permute.xlu0 %283
    %v286 = vlaneseq
    %v287 = vshrl.u32 %v286, 7
    %v288 = vsub.s32 1, %v287
    %v289 = vrot.slane %v45, %v288
    %v290 = vmul.f32 %v284, %v289
    %v291 = vadd.f32 %v280, %v290
    %vm292 = vcmask 261120
    %293 = vst.msk [vmem:[#allocation5] sm:$0xff] %vm292, %v291
    // Predicated region
    $region10: #{tpu_custom_call.1} parent=1 // pred_check
      _
    $region11: #{tpu_custom_call.1} parent=1 // pred_check_branch
      %295 = sbr.rel (0) target = $region13
    $region12: #{tpu_custom_call.1} parent=1 // pred_region
      %s297 = ssub.s32 128, 128
      %298 = vsyncadd [#allocation4], %s297
      %s300 = sshll.u32 [#allocation5], 4
      %s301 = int_to_ptr.vmem [resolvable:$true] %s300
      %303 = dma.vmem_to_hbm [thread:$0]  %s301, 128, %s1, [#allocation4]
    $region13: #{tpu_custom_call.1} parent=1 // pred_fallthru
      _
    // Predicated region
    $region14: #{tpu_custom_call.1} parent=1 // pred_check
      _
    $region15: #{tpu_custom_call.1} parent=1 // pred_check_branch
      %305 = sbr.rel (0) target = $region17
    $region16: #{tpu_custom_call.1} parent=1 // pred_region
      %306 = dma.done [#allocation4], 128
    $region17: #{tpu_custom_call.1} parent=1 // pred_fallthru
      _
    %307 = vsyncpa [#allocation3], 1
    %308 = vsyncpa [#allocation4], 1

</llo_original>
